<compile_context>
chip_gen: v6e
topology: v6e:2x2x1
jax: 0.10.0
libtpu: 0.0.40
codegen_flags: <defaults>
</compile_context>

<pallas_src>
import jax
import jax.numpy as jnp
import numpy as np
from jax.experimental import pallas as pl
from jax.experimental.pallas import tpu as pltpu


def edge_feature_kernel(idx_ref, table_ref, out_ref):
    # idx_ref:   (1, F, Lt)  int32  padded + flattened edge-type ids
    # table_ref: (H, E1p)    f32    augmented table, rows pre-scaled by 1/F
    # out_ref:   (1, H, Lt)  f32    attention-bias tile (PyTorch layout, flat)
    _, F, Lt = idx_ref.shape
    H, E1p = table_ref.shape

    idx = idx_ref[0]                                            # (F, Lt)
    iota_e = jax.lax.broadcasted_iota(jnp.int32, (E1p, Lt), 0)  # (E1p, Lt)

    # counts[e, n] = #{f : idx[f, n] == e}; F is tiny & static -> unrolled VPU,
    # starting from the first compare (no zero-init pass).
    counts = (idx[0:1, :] == iota_e).astype(jnp.float32)
    for f in range(1, F):
        counts = counts + (idx[f:f + 1, :] == iota_e).astype(jnp.float32)

    # mean_f table[idx[:, f]]  ==  (table/F).T @ counts   (single MXU matmul);
    # border cells carry count F on the appended t/F row -> exactly t.
    out_ref[0] = jnp.dot(table_ref[...], counts,
                         preferred_element_type=jnp.float32)


def edge_feature(edge_attr, edge_table, virtual_t, *, lane_tile=8192):
    """edge_attr: (bs, N, N, F) int; edge_table: (E, H) f32; virtual_t: (1, H) f32.
    Returns (bs, H, N+1, N+1) f32, matching the PyTorch module's forward."""
    bs, N, _, F = edge_attr.shape
    E, H = edge_table.shape
    L = (N + 1) * (N + 1)

    # Augmented, pre-scaled table: rows 0..E-1 = edge_table/F, row E = t/F.
    # Border cells of the padded index grid hit row E in all F slots, so the
    # matmul yields exactly t there.  Pad up to a multiple of 8 rows with zeros
    # (never indexed) so the sublane layout of the contraction dim is clean.
    # Note: padding_idx=0 in nn.Embedding only affects gradients, not forward.
    E1 = E + 1
    E1p = ((E1 + 7) // 8) * 8
    table_aug = jnp.concatenate(
        [edge_table.astype(jnp.float32),
         virtual_t.astype(jnp.float32).reshape(1, H),
         jnp.zeros((E1p - E1, H), jnp.float32)], axis=0) * (1.0 / F)
    table_t = table_aug.T                                        # (H, E1p)

    # Index prep (int32, ~F/H of the output bytes, so cheap): (bs,N,N,F) ->
    # (bs,F,N,N), pad row/col 0 of the (N+1,N+1) grid with index E, flatten.
    idx = jnp.transpose(edge_attr.astype(jnp.int32), (0, 3, 1, 2))
    idx = jnp.pad(idx, ((0, 0), (0, 0), (1, 0), (1, 0)), constant_values=E)
    idx = idx.reshape(bs, F, L)

    # Lane tile: full L when small, else a multiple of 128 chosen so the
    # double-buffered idx + out blocks plus the one-hot temp stay well within
    # the default scoped VMEM limit even for large H.  Boundary tiles are
    # masked by Pallas on the store; stale idx lanes in the pad region only
    # produce unused (masked-off) output columns.
    if L <= lane_tile:
        Lt = L
    else:
        budget = 8 * 1024 * 1024  # bytes of per-step VMEM we allow
        per_lane_bytes = 4 * (2 * F + 2 * H + E1p)   # idx(x2) + out(x2) + counts
        cap = max(128, budget // per_lane_bytes)
        Lt = max(128, (min(lane_tile, cap) // 128) * 128)
    grid = (bs, pl.cdiv(L, Lt))

    out_flat = pl.pallas_call(
        edge_feature_kernel,
        out_shape=jax.ShapeDtypeStruct((bs, H, L), jnp.float32),
        grid_spec=pltpu.PrefetchScalarGridSpec(
            num_scalar_prefetch=0,
            grid=grid,
            in_specs=[
                pl.BlockSpec((1, F, Lt), lambda b, r: (b, 0, r)),
                # Constant block index -> fetched once, resident for all steps.
                pl.BlockSpec((H, E1p), lambda b, r: (0, 0)),
            ],
            out_specs=pl.BlockSpec((1, H, Lt), lambda b, r: (b, 0, r)),
        ),
        compiler_params=pltpu.CompilerParams(
            dimension_semantics=("parallel", "parallel")),
    )(idx, table_t)

    # Free (metadata-only) reshape to the PyTorch NCHW-style layout.
    return out_flat.reshape(bs, H, N + 1, N + 1)


def edge_feature_reference(edge_attr, edge_table, virtual_t):
    """Pure-JAX reference reproducing the PyTorch forward exactly."""
    bs, N, _, F = edge_attr.shape
    H = edge_table.shape[1]
    emb = edge_table[edge_attr].mean(axis=3)          # (bs, N, N, H)
    emb = jnp.transpose(emb, (0, 3, 1, 2))            # (bs, H, N, N)
    out = jnp.zeros((bs, H, N + 1, N + 1), jnp.float32)
    out = out.at[:, :, 1:, 1:].add(emb)
    t = virtual_t.reshape(1, H, 1)
    out = out.at[:, :, 1:, 0].add(t)
    out = out.at[:, :, 0, :].add(t)
    return out


if __name__ == "__main__":
    bs, n_node, n_feat, num_edges, hidden = 2, 8, 3, 16, 32

    key = jax.random.PRNGKey(0)
    k_idx, k_tab, k_vt = jax.random.split(key, 3)

    # attn_edge_type: integer edge-type ids, shape (bs, n_node, n_node, n_feat)
    edge_attr = jax.random.randint(
        k_idx, (bs, n_node, n_node, n_feat), 0, num_edges, dtype=jnp.int32)

    # Parameters (synthetic init matching nn.Embedding normal(0, 0.02)).
    edge_table = (0.02 * jax.random.normal(k_tab, (num_edges, hidden))).astype(jnp.float32)
    virtual_t = (0.02 * jax.random.normal(k_vt, (1, hidden))).astype(jnp.float32)

    out = edge_feature(edge_attr, edge_table, virtual_t)
    out = jax.block_until_ready(out)

    ref = edge_feature_reference(edge_attr, edge_table, virtual_t)
    assert out.shape == (bs, hidden, n_node + 1, n_node + 1)
    np.testing.assert_allclose(np.asarray(out), np.asarray(ref), rtol=1e-5, atol=1e-5)

    print("KERNEL_OK")
</pallas_src>

<mosaic_0001>
module attributes {stable_mosaic.version = 11 : i64} {
  func.func @edge_feature_kernel(%arg0: i32, %arg1: i32, %arg2: memref<1x3x81xi32, #tpu.memory_space<vmem>>, %arg3: memref<32x24xf32, #tpu.memory_space<vmem>>, %arg4: memref<1x32x81xf32, #tpu.memory_space<vmem>>) attributes {dimension_semantics = [#tpu.dimension_semantics<parallel>, #tpu.dimension_semantics<parallel>], iteration_bounds = array<i64: 2, 1>, scalar_prefetch = 0 : i64, scratch_operands = 0 : i64, tpu.core_type = #tpu.core_type<tc>, window_params = [{transform_indices = @transform_0, window_bounds = array<i64: 1, 3, 81>}, {pipeline_mode = #tpu.pipeline_mode<synchronous>, transform_indices = @transform_1, window_bounds = array<i64: 32, 24>}, {transform_indices = @transform_2, window_bounds = array<i64: 1, 32, 81>}]} {
    %c0 = arith.constant 0 : index
    %c0_0 = arith.constant 0 : index
    %c0_1 = arith.constant 0 : index
    %0 = vector.load %arg2[%c0, %c0_0, %c0_1] : memref<1x3x81xi32, #tpu.memory_space<vmem>>, vector<1x3x81xi32>
    %1 = vector.shape_cast %0 : vector<1x3x81xi32> to vector<3x81xi32>
    %2 = tpu.iota {dimensions = array<i32: 0>} : vector<24x81xi32>
    %3 = vector.extract_strided_slice %1 {offsets = [0, 0], sizes = [1, 81], strides = [1, 1]} : vector<3x81xi32> to vector<1x81xi32>
    %4 = vector.broadcast %3 : vector<1x81xi32> to vector<24x81xi32>
    %5 = arith.cmpi eq, %4, %2 : vector<24x81xi32>
    %6 = arith.extui %5 : vector<24x81xi1> to vector<24x81xi32>
    %7 = arith.sitofp %6 : vector<24x81xi32> to vector<24x81xf32>
    %8 = vector.extract_strided_slice %1 {offsets = [1, 0], sizes = [1, 81], strides = [1, 1]} : vector<3x81xi32> to vector<1x81xi32>
    %9 = vector.broadcast %8 : vector<1x81xi32> to vector<24x81xi32>
    %10 = arith.cmpi eq, %9, %2 : vector<24x81xi32>
    %11 = arith.extui %10 : vector<24x81xi1> to vector<24x81xi32>
    %12 = arith.sitofp %11 : vector<24x81xi32> to vector<24x81xf32>
    %13 = arith.addf %7, %12 : vector<24x81xf32>
    %14 = vector.extract_strided_slice %1 {offsets = [2, 0], sizes = [1, 81], strides = [1, 1]} : vector<3x81xi32> to vector<1x81xi32>
    %15 = vector.broadcast %14 : vector<1x81xi32> to vector<24x81xi32>
    %16 = arith.cmpi eq, %15, %2 : vector<24x81xi32>
    %17 = arith.extui %16 : vector<24x81xi1> to vector<24x81xi32>
    %18 = arith.sitofp %17 : vector<24x81xi32> to vector<24x81xf32>
    %19 = arith.addf %13, %18 : vector<24x81xf32>
    %c0_2 = arith.constant 0 : index
    %c0_3 = arith.constant 0 : index
    %20 = vector.load %arg3[%c0_2, %c0_3] : memref<32x24xf32, #tpu.memory_space<vmem>>, vector<32x24xf32>
    %cst = arith.constant dense<0.000000e+00> : vector<32x81xf32>
    %21 = tpu.matmul %20, %19, %cst {dimension_numbers = #tpu.dot_dimension_numbers<[1], [0], [0], [1], [0, 0, 1, 1], [], []>} : vector<32x24xf32>, vector<24x81xf32>, vector<32x81xf32> -> vector<32x81xf32>
    %c0_4 = arith.constant 0 : index
    %c0_5 = arith.constant 0 : index
    %c0_6 = arith.constant 0 : index
    %22 = vector.load %arg4[%c0_4, %c0_5, %c0_6] : memref<1x32x81xf32, #tpu.memory_space<vmem>>, vector<1x32x81xf32>
    %23 = vector.shape_cast %22 : vector<1x32x81xf32> to vector<32x81xf32>
    %24 = vector.shape_cast %21 : vector<32x81xf32> to vector<1x32x81xf32>
    tpu.vector_store %arg4[%c0_4, %c0_5, %c0_6], %24 {strides = array<i32>} : memref<1x32x81xf32, #tpu.memory_space<vmem>>, vector<1x32x81xf32>,
    return
  }
  func.func @transform_0(%arg0: i32, %arg1: i32) -> (i32, i32, i32) {
    %c0_i32 = arith.constant 0 : i32
    %c0_i32_0 = arith.constant 0 : i32
    return %arg0, %c0_i32, %arg1 : i32, i32, i32
  }
  func.func @transform_1(%arg0: i32, %arg1: i32) -> (i32, i32) {
    %c0_i32 = arith.constant 0 : i32
    %c0_i32_0 = arith.constant 0 : i32
    %c0_i32_1 = arith.constant 0 : i32
    return %c0_i32, %c0_i32_0 : i32, i32
  }
  func.func @transform_2(%arg0: i32, %arg1: i32) -> (i32, i32, i32) {
    %c0_i32 = arith.constant 0 : i32
    %c0_i32_0 = arith.constant 0 : i32
    return %arg0, %c0_i32, %arg1 : i32, i32, i32
  }
}

</mosaic_0001>

<llo_original>
// kernel: tpu_custom_call.1
$region0: #{tpu_custom_call.1}
  #allocation0 [shape = 'u32[]', space=smem, size = 0x4, offset = 0x4, fixed_abs, tag = 'smem constant byte address 0x4 - core index']
  #allocation1 [shape = 'u32[144,128]{1,0:T(1,128)}', space=vmem, size = 0x12000, scoped, tag = 'internal scratch']
  %s0 = inlined_call_operand.vmem [shape: s32[2,3,81], index: 0, kind: input, shape index: {}]
  %s1 = inlined_call_operand.vmem [shape: f32[32,24], index: 1, kind: input, shape index: {}]
  %s2 = inlined_call_operand.hbm [shape: f32[2,32,81], index: 2, kind: output, shape index: {}]
  %s3 = sld [smem:[#allocation0]]
  $region41: #{tpu_custom_call.1} parent=0
    _
  %s5 = ssub.s32 1, %s3
  %s6 = scalar_select 0, %s5, %s3
  $region1: #{tpu_custom_call.1} parent=0
    #allocation2 [shape = 'u8[32768]{0}', space=vmem, size = 0x8000, scoped, tag = 'output window, operand 0']
    #allocation3 [shape = 's32[2]{0}', space=sflag, size = 0x8, scoped, tag = 'scoped memory for tpu_custom_call.1']
    %7 = vsyncpa [#allocation3], 0
    %s8 = scalar_lea.sflag [#allocation3], 1
    %9 = vsyncpa %s8, 0
    loop: start=0, step=1, limit=4
    $region2: #{tpu_custom_call.1} parent=1 // loop_pre_header
      _
    $region3: #{tpu_custom_call.1} parent=1 // loop_header
      %s11 = sphi 0, %s15
      %p12 = scmp.ge.s32.totalorder %s11, 4
      %s18 = sphi 0, %s30
      %s19 = sphi 0, %s26
      %s20 = sphi 0, %s18
      %s21 = sphi 0, %s19
      %s22 = sphi 0, %s20
      %s23 = sphi 0, %s21
      %s35 = sphi 0, %s37
      %s38 = sphi 0, %s35
      %s39 = sphi 0, %s38
      %s55 = sphi 0, %s39
      %s59 = sphi 0, %s59
      %s61 = sphi 0, %s59
      %s62 = sphi 0, %s61
      %s76 = sphi 0, %s62
      %s84 = sphi 0, %s86
      %s87 = sphi 0, %s84
      %s88 = sphi 0, %s87
      %s104 = sphi 0, %s88
    $region4: #{tpu_custom_call.1} parent=1 // loop_header_branch
      %14 = sbr.rel (%p12) target = $region8
    $region5: #{tpu_custom_call.1} parent=1 // loop_body
      %s16 = ssub.s32 %s11, 1
      %s17 = ssub.s32 %s11, 2
      %s24 = sadd.s32 1, %s19
      %p25 = scmp.ge.s32.totalorder %s24, 1
      %s26 = scalar_select %p25, 0, %s24
      %s27 = sadd.s32 1, %s18
      %s28 = scalar_select %p25, %s27, %s18
      %p29 = scmp.ge.s32.totalorder %s28, 2
      %s30 = scalar_select %p29, 0, %s28
      %s31 = ssub.s32 %s18, %s30
      %s32 = ssub.s32 %s19, %s26
      %s33 = sor.u32 %s31, %s32
      %p34 = scmp.eq.s32.totalorder %s33, 0
      %s36 = sadd.s32 %s35, 1
      %s37 = scalar_select %p34, %s35, %s36
      %p40 = pneg %p34
      %p41 = scmp.eq.s32.totalorder %s11, 1
      %p42 = por %p40, %p41
      %p43 = scmp.ne.s32.totalorder %s35, %s38
      %p44 = scmp.eq.s32.totalorder %s11, 0
      %p45 = por %p43, %p44
      %p46 = scmp.ne.s32.totalorder %s35, %s38
      %p47 = scmp.eq.s32.totalorder %s16, 1
      %p48 = por %p46, %p47
      %p49 = scmp.ne.s32.totalorder %s38, %s39
      %p50 = scmp.eq.s32.totalorder %s16, 0
      %p51 = por %p49, %p50
      %p52 = scmp.ne.s32.totalorder %s38, %s39
      %p53 = scmp.eq.s32.totalorder %s17, 1
      %p54 = por %p52, %p53
      %p56 = scmp.ne.s32.totalorder %s39, %s55
      %p57 = scmp.eq.s32.totalorder %s17, 0
      %p58 = por %p56, %p57
      %s60 = sadd.s32 %s59, 1
      %p63 = scmp.eq.s32.totalorder %s11, 1
      %p64 = scmp.ne.s32.totalorder %s59, %s61
      %p65 = scmp.eq.s32.totalorder %s11, 0
      %p66 = por %p64, %p65
      %p67 = scmp.ne.s32.totalorder %s59, %s61
      %p68 = scmp.eq.s32.totalorder %s16, 1
      %p69 = por %p67, %p68
      %p70 = scmp.ne.s32.totalorder %s61, %s62
      %p71 = scmp.eq.s32.totalorder %s16, 0
      %p72 = por %p70, %p71
      %p73 = scmp.ne.s32.totalorder %s61, %s62
      %p74 = scmp.eq.s32.totalorder %s17, 1
      %p75 = por %p73, %p74
      %p77 = scmp.ne.s32.totalorder %s62, %s76
      %p78 = scmp.eq.s32.totalorder %s17, 0
      %p79 = por %p77, %p78
      %s80 = ssub.s32 %s18, %s30
      %s81 = ssub.s32 %s19, %s26
      %s82 = sor.u32 %s80, %s81
      %p83 = scmp.eq.s32.totalorder %s82, 0
      %s85 = sadd.s32 %s84, 1
      %s86 = scalar_select %p83, %s84, %s85
      %p89 = pneg %p83
      %p90 = scmp.eq.s32.totalorder %s11, 1
      %p91 = por %p89, %p90
      %p92 = scmp.ne.s32.totalorder %s84, %s87
      %p93 = scmp.eq.s32.totalorder %s11, 0
      %p94 = por %p92, %p93
      %p95 = scmp.ne.s32.totalorder %s84, %s87
      %p96 = scmp.eq.s32.totalorder %s16, 1
      %p97 = por %p95, %p96
      %p98 = scmp.ne.s32.totalorder %s87, %s88
      %p99 = scmp.eq.s32.totalorder %s16, 0
      %p100 = por %p98, %p99
      %p101 = scmp.ne.s32.totalorder %s87, %s88
      %p102 = scmp.eq.s32.totalorder %s17, 1
      %p103 = por %p101, %p102
      %p105 = scmp.ne.s32.totalorder %s88, %s104
      %p106 = scmp.eq.s32.totalorder %s17, 0
      %p107 = por %p105, %p106
      %p108 = scmp.le.s32.totalorder 1, %s11
      %p109 = scmp.lt.s32.totalorder %s11, 3
      %p110 = pnand %p108, %p109
      %p111 = pneg %p110
      // Predicated region
      $region9: #{tpu_custom_call.1} parent=5 // pred_check
        _
      $region10: #{tpu_custom_call.1} parent=5 // pred_check_branch
        %113 = sbr.rel (%p110) target = $region12
      $region11: #{tpu_custom_call.1} parent=5 // pred_region
        %s114 = ssub.s32 %s11, 1
        // Predicated region
        $region13: #{tpu_custom_call.1} parent=11 // pred_check
          %p115 = pneg %p72
        $region14: #{tpu_custom_call.1} parent=11 // pred_check_branch
          %117 = sbr.rel (%p115) target = $region16
        $region15: #{tpu_custom_call.1} parent=11 // pred_region
          _
        $region16: #{tpu_custom_call.1} parent=11 // pred_fallthru
          _
      $region12: #{tpu_custom_call.1} parent=5 // pred_fallthru
        _
      %p118 = scmp.lt.s32.totalorder %s11, 2
      // Predicated region
      $region17: #{tpu_custom_call.1} parent=5 // pred_check
        %p119 = pneg %p118
      $region18: #{tpu_custom_call.1} parent=5 // pred_check_branch
        %121 = sbr.rel (%p119) target = $region20
      $region19: #{tpu_custom_call.1} parent=5 // pred_region
        // Predicated region
        $region21: #{tpu_custom_call.1} parent=19 // pred_check
          %p122 = pneg %p45
        $region22: #{tpu_custom_call.1} parent=19 // pred_check_branch
          %124 = sbr.rel (%p122) target = $region24
        $region23: #{tpu_custom_call.1} parent=19 // pred_region
          %p125 = scmp.lt.s32.totalorder %s18, 1
          %s126 = scalar_select %p125, %s18, 1
          %p127 = scmp.lt.s32.totalorder %s19, 0
          %s128 = scalar_select %p127, %s19, 0
          %s129 = sadd.s32 %s128, %s126
          %s130 = smul.addr %s129, 4
          %s131 = scalar_lea.vmem %s0, %s130
        $region24: #{tpu_custom_call.1} parent=19 // pred_fallthru
          _
      $region20: #{tpu_custom_call.1} parent=5 // pred_fallthru
        _
      %p132 = scmp.le.s32.totalorder 1, %s11
      %p133 = scmp.lt.s32.totalorder %s11, 3
      %p134 = pnand %p132, %p133
      %p135 = pneg %p134
      // Predicated region
      $region25: #{tpu_custom_call.1} parent=5 // pred_check
        _
      $region26: #{tpu_custom_call.1} parent=5 // pred_check_branch
        %137 = sbr.rel (%p134) target = $region28
      $region27: #{tpu_custom_call.1} parent=5 // pred_region
        %s138 = ssub.s32 %s11, 1
        %p139 = scmp.lt.s32.totalorder %s20, 1
        %s140 = scalar_select %p139, %s20, 1
        %p141 = scmp.lt.s32.totalorder %s21, 0
        %s142 = scalar_select %p141, %s21, 0
        %s143 = sadd.s32 %s142, %s140
        %s144 = smul.addr %s143, 4
        %s145 = scalar_lea.vmem %s0, %s144
        %p146 = pneg %p51
        %p147 = pneg %p48
        %p148 = pneg %p72
        %p149 = pneg %p69
        %p150 = pneg %p100
        %p151 = pneg %p97
        %s152 = sand.u32 %s87, 1
        %s153 = scalar_lea.sflag [#allocation3], %s152
        %s154 = sand.u32 %s87, 1
        %s155 = smul.addr %s154, 32
        %s156 = scalar_lea.vmem [#allocation2], %s155
        %p157 = scmp.lt.s32.totalorder %s20, 1
        %s158 = scalar_select %p157, %s20, 1
        %p159 = scmp.lt.s32.totalorder %s21, 0
        %s160 = scalar_select %p159, %s21, 0
        %s161 = sadd.s32 %s160, %s158
        %s162 = smul.addr %s161, 4
        %s163 = scalar_lea.vmem %s0, %s162
        %v164 = vld [vmem:[%s163] sm:$0x7]
        %v165 = vlaneseq
        %v166 = vshrl.u32 %v165, 7
        %v167 = vadd.s32 %v166, 8
        %v168 = vadd.s32 %v166, 16
        %v169 = vlaneseq
        %v170 = vshrl.u32 %v169, 7
        %v171 = vsub.s32 0, %v170
        %v172 = vrot.slane %v164, %v171
        %vm173 = vcmp.eq.s32.totalorder %v172, %v166
        %vm174 = vcmp.eq.s32.totalorder %v172, %v167
        %vm175 = vcmp.eq.s32.totalorder %v172, %v168
        %v176 = vsel %vm173, 1, 0
        %v177 = vsel %vm174, 1, 0
        %v178 = vsel %vm175, 1, 0
        %v179 = vcvt.s32.f32 %v176
        %v180 = vcvt.s32.f32 %v177
        %v181 = vcvt.s32.f32 %v178
        %v182 = vlaneseq
        %v183 = vshrl.u32 %v182, 7
        %v184 = vsub.s32 1, %v183
        %v185 = vrot.slane %v164, %v184
        %vm186 = vcmp.eq.s32.totalorder %v185, %v166
        %vm187 = vcmp.eq.s32.totalorder %v185, %v167
        %vm188 = vcmp.eq.s32.totalorder %v185, %v168
        %v189 = vsel %vm186, 1, 0
        %v190 = vsel %vm187, 1, 0
        %v191 = vsel %vm188, 1, 0
        %v192 = vcvt.s32.f32 %v189
        %v193 = vcvt.s32.f32 %v190
        %v194 = vcvt.s32.f32 %v191
        %v195 = vadd.f32 %v179, %v192
        %v196 = vadd.f32 %v180, %v193
        %v197 = vadd.f32 %v181, %v194
        %v198 = vlaneseq
        %v199 = vshrl.u32 %v198, 7
        %v200 = vsub.s32 2, %v199
        %v201 = vrot.slane %v164, %v200
        %vm202 = vcmp.eq.s32.totalorder %v201, %v166
        %vm203 = vcmp.eq.s32.totalorder %v201, %v167
        %vm204 = vcmp.eq.s32.totalorder %v201, %v168
        %v205 = vsel %vm202, 1, 0
        %v206 = vsel %vm203, 1, 0
        %v207 = vsel %vm204, 1, 0
        %v208 = vcvt.s32.f32 %v205
        %v209 = vcvt.s32.f32 %v206
        %v210 = vcvt.s32.f32 %v207
        %v211 = vadd.f32 %v195, %v208
        %v212 = vadd.f32 %v196, %v209
        %v213 = vadd.f32 %v197, %v210
        %v214 = vld [vmem:[%s1] sm:$0xff]
        %v215 = vld [vmem:[%s1 + $0x8] sm:$0xff]
        %v216 = vld [vmem:[%s1 + $0x10] sm:$0xff]
        %v217 = vld [vmem:[%s1 + $0x18] sm:$0xff]
        %vm218 = vcmask 195584
        %v220 = vsel %vm218, %v214, 0
        %v223 = vsel %vm218, %v215, 0
        %v226 = vsel %vm218, %v216, 0
        %v229 = vsel %vm218, %v217, 0
        %231 = vmatprep.subr.mxu0 0.0
        %232 = vmatpush1.msra.mxu0 0.0
        %233 = vmatprep.subr.mxu0 0.0
        %234 = vmatpush1.msra.mxu0 0.0
        %235 = vmatprep.subr.mxu0 0.0
        %236 = vmatpush1.msra.mxu0 0.0
        %237 = vmatprep.subr.mxu0 0.0
        %238 = vmatpush1.msra.mxu0 0.0
        %239 = vmatprep.subr.mxu0 0.0
        %240 = vmatpush1.msra.mxu0 0.0
        %241 = vmatprep.subr.mxu0 0.0
        %242 = vmatpush1.msra.mxu0 0.0
        %243 = vmatprep.subr.mxu0 0.0
        %244 = vmatpush1.msra.mxu0 0.0
        %245 = vmatprep.subr.mxu0 0.0
        %246 = vmatpush1.msra.mxu0 0.0
        %247 = vmatprep.subr.mxu0 0.0
        %248 = vmatpush1.msra.mxu0 0.0
        %249 = vmatprep.subr.mxu0 0.0
        %250 = vmatpush1.msra.mxu0 0.0
        %251 = vmatprep.subr.mxu0 0.0
        %252 = vmatpush1.msra.mxu0 0.0
        %253 = vmatprep.subr.mxu0 0.0
        %254 = vmatpush1.msra.mxu0 0.0
        %255 = vmatprep.subr.mxu0 0.0
        %256 = vmatpush1.msra.mxu0 0.0
        %257 = vmatprep.subr.mxu0 0.0
        %258 = vmatpush1.msra.mxu0 %v213
        %259 = vmatprep.subr.mxu0 0.0
        %260 = vmatpush1.msra.mxu0 %v212
        %261 = vmatprep.subr.mxu0 0.0
        %262 = vmatpush1.msra.mxu0 %v211
        %263 = vmatprep.subr.mxu0 0.0
        %264 = vmatpush2.msra.mxu0 0.0
        %265 = vmatprep.subr.mxu0 0.0
        %266 = vmatpush2.msra.mxu0 0.0
        %267 = vmatprep.subr.mxu0 0.0
        %268 = vmatpush2.msra.mxu0 0.0
        %269 = vmatprep.subr.mxu0 0.0
        %270 = vmatpush2.msra.mxu0 0.0
        %271 = vmatprep.subr.mxu0 0.0
        %272 = vmatpush2.msra.mxu0 0.0
        %273 = vmatprep.subr.mxu0 0.0
        %274 = vmatpush2.msra.mxu0 0.0
        %275 = vmatprep.subr.mxu0 0.0
        %276 = vmatpush2.msra.mxu0 0.0
        %277 = vmatprep.subr.mxu0 0.0
        %278 = vmatpush2.msra.mxu0 0.0
        %279 = vmatprep.subr.mxu0 0.0
        %280 = vmatpush2.msra.mxu0 0.0
        %281 = vmatprep.subr.mxu0 0.0
        %282 = vmatpush2.msra.mxu0 0.0
        %283 = vmatprep.subr.mxu0 0.0
        %284 = vmatpush2.msra.mxu0 0.0
        %285 = vmatprep.subr.mxu0 0.0
        %286 = vmatpush2.msra.mxu0 0.0
        %287 = vmatprep.subr.mxu0 0.0
        %288 = vmatpush2.msra.mxu0 0.0
        %289 = vmatprep.subr.mxu0 0.0
        %290 = vmatpush2.msra.mxu0 0.0
        %291 = vmatprep.subr.mxu0 0.0
        %292 = vmatpush2.msra.mxu0 0.0
        %293 = vmatprep.subr.mxu0 0.0
        %294 = vmatpush2.msra.mxu0 0.0
        %295 = vmatprep.mubr.f32.mxu0 0.0
        %296 = vmatmul.mubr.f32.gmra.mxu0 %v220
        %v297 = vpop.f32.mrf.mxu0
        %v298 = vadd.f32 0.0, %v297
        %v299 = vpop.f32.mrf.mxu0
        %300 = vmatprep.mubr.f32.mxu0 0.0
        %301 = vmatmul.mubr.f32.gmra.mxu0 %v223
        %v302 = vpop.f32.mrf.mxu0
        %v303 = vadd.f32 0.0, %v302
        %v304 = vpop.f32.mrf.mxu0
        %305 = vmatprep.mubr.f32.mxu0 0.0
        %306 = vmatmul.mubr.f32.gmra.mxu0 %v226
        %v307 = vpop.f32.mrf.mxu0
        %v308 = vadd.f32 0.0, %v307
        %v309 = vpop.f32.mrf.mxu0
        %310 = vmatprep.mubr.f32.mxu0 0.0
        %311 = vmatmul.mubr.f32.gmra.mxu0 %v229
        %v312 = vpop.f32.mrf.mxu0
        %v313 = vadd.f32 0.0, %v312
        %v314 = vpop.f32.mrf.mxu0
        %315 = vdwg.mxu0
        %vm316 = vcmask 662528
        %317 = vst.msk [vmem:[%s156] sm:$0xff] %vm316, %v298
        %318 = vst.msk [vmem:[%s156 + $0x8] sm:$0xff] %vm316, %v303
        %319 = vst.msk [vmem:[%s156 + $0x10] sm:$0xff] %vm316, %v308
        %320 = vst.msk [vmem:[%s156 + $0x18] sm:$0xff] %vm316, %v313
        %s321 = sand.u32 %s87, 1
        %s322 = scalar_lea.sflag [#allocation3], %s321
        %s323 = sand.u32 %s87, 1
        %s324 = smul.addr %s323, 32
        %s325 = scalar_lea.vmem [#allocation2], %s324
        // Predicated region
        $region29: #{tpu_custom_call.1} parent=27 // pred_check
          %p326 = pneg %p97
        $region30: #{tpu_custom_call.1} parent=27 // pred_check_branch
          %328 = sbr.rel (%p326) target = $region32
        $region31: #{tpu_custom_call.1} parent=27 // pred_region
          %s330 = ssub.s32 512, 512
          %331 = vsyncadd %s322, %s330
          %s332 = smul.addr %s20, 4
          %s333 = sadd.s32 %s21, %s332
          %s334 = smul.addr %s333, 128
          %s335 = scalar_lea.hbm %s2, %s334
          %s336 = sshll.u32 %s325, 4
          %s337 = int_to_ptr.vmem [resolvable:$true] %s336
          %342 = dma.vmem_to_hbm [thread:$0]  %s337, 512, %s335, %s322, 128, 128, 8
        $region32: #{tpu_custom_call.1} parent=27 // pred_fallthru
          _
      $region28: #{tpu_custom_call.1} parent=5 // pred_fallthru
        _
      %p343 = scmp.le.s32.totalorder 2, %s11
      // Predicated region
      $region33: #{tpu_custom_call.1} parent=5 // pred_check
        %p344 = pneg %p343
      $region34: #{tpu_custom_call.1} parent=5 // pred_check_branch
        %346 = sbr.rel (%p344) target = $region36
      $region35: #{tpu_custom_call.1} parent=5 // pred_region
        %s347 = ssub.s32 %s11, 2
        // Predicated region
        $region37: #{tpu_custom_call.1} parent=35 // pred_check
          %p348 = pneg %p103
        $region38: #{tpu_custom_call.1} parent=35 // pred_check_branch
          %350 = sbr.rel (%p348) target = $region40
        $region39: #{tpu_custom_call.1} parent=35 // pred_region
          %s351 = sand.u32 %s88, 1
          %s352 = scalar_lea.sflag [#allocation3], %s351
          %s353 = sand.u32 %s88, 1
          %s354 = smul.addr %s353, 32
          %s355 = scalar_lea.vmem [#allocation2], %s354
          %356 = dma.done %s352, 512
        $region40: #{tpu_custom_call.1} parent=35 // pred_fallthru
          _
      $region36: #{tpu_custom_call.1} parent=5 // pred_fallthru
        _
    $region6: #{tpu_custom_call.1} parent=1 // loop_footer
      %s15 = sadd.s32 1, %s11
    $region7: #{tpu_custom_call.1} parent=1 // loop_footer_branch
      %10 = sbr.rel target = $region3
    $region8: #{tpu_custom_call.1} parent=1 // loop_exit
      _
    %357 = vsyncpa [#allocation3], 1
    %s358 = scalar_lea.sflag [#allocation3], 1
    %359 = vsyncpa %s358, 1

</llo_original>
